<compile_context>
chip_gen: v6e
topology: v6e:2x2x1
jax: 0.10.0
libtpu: 0.0.40
codegen_flags: <defaults>
</compile_context>

<pallas_src>
import functools
from itertools import permutations

import numpy as np
import jax
import jax.numpy as jnp
from jax.experimental import pallas as pl
from jax.experimental.pallas import tpu as pltpu


_EPS = 1e-7


def _round_up(x, m):
    return ((x + m - 1) // m) * m


# ----------------------------------------------------------------------------
# Pallas kernel: per-image [Q, T_pad] matching-cost block
# ----------------------------------------------------------------------------
def _cost_kernel(w_class, w_bbox, w_giou,
                 logits_ref,      # (Qp, C)  f32  classification logits
                 boxes_ref,       # (Qp, 4)  f32  predicted boxes, xyxy, un-normalized
                 img_out_ref,     # (1, 4)   f32  image_size_xyxy for this image
                 tgt_ids_ref,     # (1, Tp)  i32  target labels (pad = num_classes)
                 tgt_boxes_ref,   # (4, Tp)  f32  target boxes xyxy, transposed (pad [0,0,1,1])
                 img_tgt_ref,     # (4, Tp)  f32  image_size_xyxy_tgt, transposed (pad 1s)
                 cost_ref):       # (Qp, Tp) f32  output cost block
    # ---- class cost: softmax denominator folded into the one-hot matmul -------
    logits = logits_ref[...]
    m = jnp.max(logits, axis=-1, keepdims=True)
    e = jnp.exp(logits - m)                                            # (Qp, C)
    inv_sum = pl.reciprocal(jnp.sum(e, axis=-1, keepdims=True), approx=True)

    num_classes = logits.shape[-1]
    t_pad = tgt_ids_ref.shape[-1]
    class_iota = jax.lax.broadcasted_iota(jnp.int32, (num_classes, t_pad), 0)
    onehot = (class_iota == tgt_ids_ref[...]).astype(jnp.float32)      # (C, Tp)
    s = jnp.dot(e, onehot, preferred_element_type=jnp.float32)         # (Qp, Tp) MXU
    cost_class = -(s * inv_sum)

    # ---- slice coordinates once; reuse for L1 cost and GIoU -------------------
    ob = boxes_ref[...]                     # (Qp, 4)
    tb = tgt_boxes_ref[...]                 # (4, Tp)
    inv_img_o = 1.0 / img_out_ref[...]      # (1, 4)   tiny, exact
    inv_img_t = 1.0 / img_tgt_ref[...]      # (4, Tp)  prologue-only, exact

    xo = [ob[:, k:k + 1] for k in range(4)]         # (Qp, 1) each
    xt = [tb[k:k + 1, :] for k in range(4)]         # (1, Tp) each

    # ---- cost_bbox = L1 cdist of image-size-normalized boxes ------------------
    cost_bbox = jnp.zeros((logits.shape[0], t_pad), jnp.float32)
    for k in range(4):
        on = xo[k] * inv_img_o[:, k:k + 1]          # (Qp, 1)
        tn = xt[k] * inv_img_t[k:k + 1, :]          # (1, Tp)
        cost_bbox = cost_bbox + jnp.abs(on - tn)

    # ---- cost_giou = -generalized_box_iou on raw xyxy boxes -------------------
    x1o, y1o, x2o, y2o = xo
    x1t, y1t, x2t, y2t = xt
    area_o = (x2o - x1o) * (y2o - y1o)              # (Qp, 1)
    area_t = (x2t - x1t) * (y2t - y1t)              # (1, Tp)

    iw = jnp.maximum(jnp.minimum(x2o, x2t) - jnp.maximum(x1o, x1t), 0.0)
    ih = jnp.maximum(jnp.minimum(y2o, y2t) - jnp.maximum(y1o, y1t), 0.0)
    inter = iw * ih                                 # (Qp, Tp)
    union = area_o + area_t - inter
    iou = inter * pl.reciprocal(jnp.maximum(union, _EPS), approx=True)

    cw = jnp.maximum(jnp.maximum(x2o, x2t) - jnp.minimum(x1o, x1t), 0.0)
    ch = jnp.maximum(jnp.maximum(y2o, y2t) - jnp.minimum(y1o, y1t), 0.0)
    area_c = jnp.maximum(cw * ch, _EPS)
    giou = iou - (area_c - union) * pl.reciprocal(area_c, approx=True)

    cost_ref[...] = (w_bbox * cost_bbox + w_class * cost_class - w_giou * giou)


def _compute_cost_matrix(logits, boxes, img_out, tgt_ids, tgt_boxes_t,
                         img_tgt_t, *, cost_class, cost_bbox, cost_giou):
    bs, q_pad, num_classes = logits.shape
    t_pad = tgt_ids.shape[-1]
    kernel = functools.partial(_cost_kernel, cost_class, cost_bbox, cost_giou)
    return pl.pallas_call(
        kernel,
        out_shape=jax.ShapeDtypeStruct((bs, q_pad, t_pad), jnp.float32),
        grid=(bs,),
        in_specs=[
            pl.BlockSpec((None, q_pad, num_classes), lambda b: (b, 0, 0)),
            pl.BlockSpec((None, q_pad, 4), lambda b: (b, 0, 0)),
            pl.BlockSpec((None, 1, 4), lambda b: (b, 0, 0)),
            pl.BlockSpec((None, 1, t_pad), lambda b: (b, 0, 0)),
            pl.BlockSpec((None, 4, t_pad), lambda b: (b, 0, 0)),
            pl.BlockSpec((None, 4, t_pad), lambda b: (b, 0, 0)),
        ],
        out_specs=pl.BlockSpec((None, q_pad, t_pad), lambda b: (b, 0, 0)),
        compiler_params=pltpu.CompilerParams(
            dimension_semantics=("parallel",)),
    )(logits, boxes, img_out, tgt_ids, tgt_boxes_t, img_tgt_t)


# ----------------------------------------------------------------------------
# Host-side optimal 1-to-1 assignment: Jonker-Volgenant / Hungarian (O(n^2 m)),
# equivalent to scipy.optimize.linear_sum_assignment.
# ----------------------------------------------------------------------------
# TODO(synk): the LAP solve itself is sequential augmenting-path control flow
# with no clean Pallas equivalent; it stays on the host.
def _linear_sum_assignment_np(cost):
    cost = np.asarray(cost, dtype=np.float64)
    transposed = False
    if cost.shape[0] > cost.shape[1]:
        cost = cost.T
        transposed = True
    n, m = cost.shape                       # n <= m
    if n == 0 or m == 0:
        empty = np.zeros((0,), np.int64)
        return empty, empty

    u = np.zeros(n + 1)
    v = np.zeros(m + 1)
    p = np.zeros(m + 1, dtype=np.int64)     # p[j] = row (1-based) matched to col j
    way = np.zeros(m + 1, dtype=np.int64)

    for i in range(1, n + 1):
        p[0] = i
        j0 = 0
        minv = np.full(m + 1, np.inf)
        used = np.zeros(m + 1, dtype=bool)
        while True:
            used[j0] = True
            i0 = p[j0]
            cur = cost[i0 - 1, :] - u[i0] - v[1:]
            unused = ~used[1:]
            mv = minv[1:]
            wy = way[1:]
            improve = unused & (cur < mv)
            mv[improve] = cur[improve]
            wy[improve] = j0
            masked = np.where(unused, mv, np.inf)
            j1 = int(np.argmin(masked)) + 1
            delta = masked[j1 - 1]
            used_idx = np.nonzero(used)[0]
            u[p[used_idx]] += delta
            v[used_idx] -= delta
            mv[unused] -= delta
            j0 = j1
            if p[j0] == 0:
                break
        while True:
            j1 = way[j0]
            p[j0] = p[j1]
            j0 = j1
            if j0 == 0:
                break

    matched = p[1:] != 0
    row_ind = (p[1:][matched] - 1).astype(np.int64)
    col_ind = np.nonzero(matched)[0].astype(np.int64)
    if transposed:
        row_ind, col_ind = col_ind, row_ind
    order = np.argsort(row_ind, kind="stable")
    return row_ind[order], col_ind[order]


def _brute_force_best_cost(cost):
    """Optimal assignment cost by enumeration (only for tiny test shapes)."""
    cost = np.asarray(cost, np.float64)
    n_r, n_c = cost.shape
    if n_r == 0 or n_c == 0:
        return 0.0
    best = np.inf
    if n_r >= n_c:
        cols = np.arange(n_c)
        for rows in permutations(range(n_r), n_c):
            best = min(best, cost[list(rows), cols].sum())
    else:
        rows = np.arange(n_r)
        for cols in permutations(range(n_c), n_r):
            best = min(best, cost[rows, list(cols)].sum())
    return best


# ----------------------------------------------------------------------------
# HungarianMatcher forward (glue + Pallas cost kernel + host assignment)
# ----------------------------------------------------------------------------
def hungarian_matcher(outputs, targets, cost_class=1.0, cost_bbox=1.0,
                      cost_giou=1.0):
    assert cost_class != 0 or cost_bbox != 0 or cost_giou != 0
    pred_logits = outputs["pred_logits"]          # (bs, Q, num_classes)
    pred_boxes = outputs["pred_boxes"]            # (bs, Q, 4)
    bs, num_queries, num_classes = pred_logits.shape

    sizes = [int(v["boxes_xyxy"].shape[0]) for v in targets]
    t_max = max(sizes) if sizes else 0
    t_pad = _round_up(max(t_max, 1), 128)         # lane-dense target axis
    q_pad = _round_up(num_queries, 8)             # sublane-aligned query axis

    # --- prediction side (pad Q with benign rows) ------------------------------
    logits = pred_logits.astype(jnp.float32)
    boxes = pred_boxes.astype(jnp.float32)
    if q_pad != num_queries:
        logits = jnp.pad(logits, ((0, 0), (0, q_pad - num_queries), (0, 0)))
        pad_box = jnp.tile(jnp.array([0., 0., 1., 1.], jnp.float32)[None, None, :],
                           (bs, q_pad - num_queries, 1))
        boxes = jnp.concatenate([boxes, pad_box], axis=1)

    # per-image image size row, indexed by the grid (no Q-times repeat)
    img_out = jnp.stack([v["image_size_xyxy"] for v in targets]
                        ).astype(jnp.float32)[:, None, :]             # (bs, 1, 4)

    # --- target side: per-image, padded to t_pad with safe dummies -------------
    ids_np = np.full((bs, 1, t_pad), num_classes, dtype=np.int32)     # unused class
    tb_np = np.zeros((bs, 4, t_pad), dtype=np.float32)
    tb_np[:, 2:, :] = 1.0                                             # dummy [0,0,1,1]
    it_np = np.ones((bs, 4, t_pad), dtype=np.float32)                 # dummy size 1
    for b, v in enumerate(targets):
        sz = sizes[b]
        if sz:
            ids_np[b, 0, :sz] = np.asarray(v["labels"], dtype=np.int32)
            tb_np[b, :, :sz] = np.asarray(v["boxes_xyxy"], dtype=np.float32).T
            it_np[b, :, :sz] = np.asarray(v["image_size_xyxy_tgt"],
                                          dtype=np.float32).T
    tgt_ids = jnp.asarray(ids_np)
    tgt_boxes_t = jnp.asarray(tb_np)
    img_tgt_t = jnp.asarray(it_np)

    cost = _compute_cost_matrix(
        logits, boxes, img_out, tgt_ids, tgt_boxes_t, img_tgt_t,
        cost_class=float(cost_class), cost_bbox=float(cost_bbox),
        cost_giou=float(cost_giou))

    c = np.asarray(jax.block_until_ready(cost))   # (bs, q_pad, t_pad)

    indices = []
    for b, sz in enumerate(sizes):
        ci = c[b, :num_queries, :sz]
        indices.append(_linear_sum_assignment_np(ci))
    return ([(np.asarray(i, dtype=np.int64), np.asarray(j, dtype=np.int64))
             for i, j in indices],
            c[:, :num_queries, :])


# ----------------------------------------------------------------------------
# Pure-numpy reference for the cost matrix (sanity check of the kernel)
# ----------------------------------------------------------------------------
def _cost_reference(logits2d, boxes2d, img_out, tgt_ids, tgt_bbox, img_tgt,
                    w_class, w_bbox, w_giou):
    logits2d = np.asarray(logits2d, np.float64)
    prob = np.exp(logits2d - logits2d.max(-1, keepdims=True))
    prob /= prob.sum(-1, keepdims=True)
    cost_class = -prob[:, np.asarray(tgt_ids)]
    ob = np.asarray(boxes2d, np.float64) / np.asarray(img_out, np.float64)
    tb = np.asarray(tgt_bbox, np.float64) / np.asarray(img_tgt, np.float64)
    cost_bbox = np.abs(ob[:, None, :] - tb[None, :, :]).sum(-1)
    o = np.asarray(boxes2d, np.float64)
    t = np.asarray(tgt_bbox, np.float64)
    area_o = (o[:, 2] - o[:, 0]) * (o[:, 3] - o[:, 1])
    area_t = (t[:, 2] - t[:, 0]) * (t[:, 3] - t[:, 1])
    lt = np.maximum(o[:, None, :2], t[None, :, :2])
    rb = np.minimum(o[:, None, 2:], t[None, :, 2:])
    wh = np.clip(rb - lt, 0, None)
    inter = wh[..., 0] * wh[..., 1]
    union = area_o[:, None] + area_t[None, :] - inter
    iou = inter / union
    clt = np.minimum(o[:, None, :2], t[None, :, :2])
    crb = np.maximum(o[:, None, 2:], t[None, :, 2:])
    cwh = np.clip(crb - clt, 0, None)
    area_c = cwh[..., 0] * cwh[..., 1]
    giou = iou - (area_c - union) / area_c
    return w_bbox * cost_bbox + w_class * cost_class + w_giou * (-giou)


# ----------------------------------------------------------------------------
# Demo
# ----------------------------------------------------------------------------
def _random_boxes(key, n, w, h):
    k1, k2, k3, k4 = jax.random.split(key, 4)
    x1 = jax.random.uniform(k1, (n, 1), minval=0.0, maxval=0.5 * w)
    y1 = jax.random.uniform(k2, (n, 1), minval=0.0, maxval=0.5 * h)
    bw = jax.random.uniform(k3, (n, 1), minval=4.0, maxval=0.45 * w)
    bh = jax.random.uniform(k4, (n, 1), minval=4.0, maxval=0.45 * h)
    return jnp.concatenate([x1, y1, x1 + bw, y1 + bh], axis=-1).astype(jnp.float32)


if __name__ == "__main__":
    key = jax.random.PRNGKey(0)
    bs, num_queries, num_classes = 2, 8, 16
    sizes = [3, 2]
    img_wh = [(320.0, 240.0), (640.0, 480.0)]

    keys = jax.random.split(key, 8)
    pred_logits = jax.random.normal(keys[0], (bs, num_queries, num_classes),
                                    dtype=jnp.float32)
    pred_boxes = jnp.stack(
        [_random_boxes(keys[1 + b], num_queries, *img_wh[b]) for b in range(bs)])

    targets = []
    for b in range(bs):
        w, h = img_wh[b]
        n = sizes[b]
        labels = jax.random.randint(keys[3 + b], (n,), 0, num_classes,
                                    dtype=jnp.int32)
        boxes = _random_boxes(keys[5 + b], n, w, h)
        img_xyxy = jnp.array([w, h, w, h], dtype=jnp.float32)
        targets.append({
            "labels": labels,
            "boxes_xyxy": boxes,
            "image_size_xyxy": img_xyxy,
            "image_size_xyxy_tgt": jnp.tile(img_xyxy[None, :], (n, 1)),
        })

    outputs = {"pred_logits": pred_logits, "pred_boxes": pred_boxes}

    indices, cost_mat = hungarian_matcher(outputs, targets,
                                          cost_class=1.0, cost_bbox=1.0,
                                          cost_giou=1.0)

    # ---- sanity-check kernel cost matrix vs numpy reference -------------------
    tgt_ids_all = np.concatenate([np.asarray(v["labels"]) for v in targets])
    tgt_bbox_all = np.concatenate([np.asarray(v["boxes_xyxy"]) for v in targets])
    img_out_all = np.repeat(np.stack([np.asarray(v["image_size_xyxy"])
                                      for v in targets]), num_queries, axis=0)
    img_tgt_all = np.concatenate([np.asarray(v["image_size_xyxy_tgt"])
                                  for v in targets])
    ref = _cost_reference(np.asarray(pred_logits).reshape(-1, num_classes),
                          np.asarray(pred_boxes).reshape(-1, 4),
                          img_out_all, tgt_ids_all, tgt_bbox_all, img_tgt_all,
                          1.0, 1.0, 1.0)
    start = 0
    for b, sz in enumerate(sizes):
        ref_b = ref[b * num_queries:(b + 1) * num_queries, start:start + sz]
        got_b = cost_mat[b, :, :sz]
        assert np.allclose(got_b, ref_b, rtol=2e-3, atol=2e-3), \
            f"cost matrix mismatch vs reference for image {b}"
        start += sz

    # ---- sanity-check the LAP solver against brute-force optimum --------------
    start = 0
    for b, (i, j) in enumerate(indices):
        sz = sizes[b]
        assert len(i) == len(j) == min(num_queries, sz)
        assert i.dtype == np.int64 and j.dtype == np.int64
        ref_b = ref[b * num_queries:(b + 1) * num_queries, start:start + sz]
        got_cost = float(ref_b[i, j].sum())
        best_cost = _brute_force_best_cost(ref_b)
        assert abs(got_cost - best_cost) < 1e-6, "assignment is not optimal"
        start += sz

    jax.block_until_ready(jnp.asarray(cost_mat))
    print("KERNEL_OK")
</pallas_src>

<mosaic_0001>
module attributes {stable_mosaic.version = 11 : i64} {
  func.func @_cost_kernel(%arg0: i32, %arg1: memref<1x8x16xf32, #tpu.memory_space<vmem>>, %arg2: memref<1x8x4xf32, #tpu.memory_space<vmem>>, %arg3: memref<1x1x4xf32, #tpu.memory_space<vmem>>, %arg4: memref<1x1x128xi32, #tpu.memory_space<vmem>>, %arg5: memref<1x4x128xf32, #tpu.memory_space<vmem>>, %arg6: memref<1x4x128xf32, #tpu.memory_space<vmem>>, %arg7: memref<1x8x128xf32, #tpu.memory_space<vmem>>) attributes {dimension_semantics = [#tpu.dimension_semantics<parallel>], iteration_bounds = array<i64: 2>, scalar_prefetch = 0 : i64, scratch_operands = 0 : i64, tpu.core_type = #tpu.core_type<tc>, window_params = [{transform_indices = @transform_0, window_bounds = array<i64: 1, 8, 16>}, {transform_indices = @transform_1, window_bounds = array<i64: 1, 8, 4>}, {transform_indices = @transform_2, window_bounds = array<i64: 1, 1, 4>}, {transform_indices = @transform_3, window_bounds = array<i64: 1, 1, 128>}, {transform_indices = @transform_4, window_bounds = array<i64: 1, 4, 128>}, {transform_indices = @transform_5, window_bounds = array<i64: 1, 4, 128>}, {transform_indices = @transform_6, window_bounds = array<i64: 1, 8, 128>}]} {
    %c0 = arith.constant 0 : index
    %c0_0 = arith.constant 0 : index
    %c0_1 = arith.constant 0 : index
    %0 = vector.load %arg1[%c0, %c0_0, %c0_1] : memref<1x8x16xf32, #tpu.memory_space<vmem>>, vector<1x8x16xf32>
    %1 = vector.shape_cast %0 : vector<1x8x16xf32> to vector<8x16xf32>
    %cst = arith.constant dense<0xFF800000> : vector<8xf32>
    %2 = vector.multi_reduction <maximumf>, %1, %cst [1] : vector<8x16xf32> to vector<8xf32>
    %3 = vector.shape_cast %2 : vector<8xf32> to vector<8x1xf32>
    %4 = vector.broadcast %3 : vector<8x1xf32> to vector<8x16xf32>
    %5 = arith.subf %1, %4 : vector<8x16xf32>
    %6 = math.exp %5 : vector<8x16xf32>
    %cst_2 = arith.constant dense<0.000000e+00> : vector<8xf32>
    %7 = vector.multi_reduction <add>, %6, %cst_2 [1] : vector<8x16xf32> to vector<8xf32>
    %8 = vector.shape_cast %7 : vector<8xf32> to vector<8x1xf32>
    %9 = tpu.reciprocal %8 {approx = true} : vector<8x1xf32> -> vector<8x1xf32>
    %10 = tpu.iota {dimensions = array<i32: 0>} : vector<16x128xi32>
    %c0_3 = arith.constant 0 : index
    %c0_4 = arith.constant 0 : index
    %c0_5 = arith.constant 0 : index
    %11 = vector.load %arg4[%c0_3, %c0_4, %c0_5] : memref<1x1x128xi32, #tpu.memory_space<vmem>>, vector<1x1x128xi32>
    %12 = vector.shape_cast %11 : vector<1x1x128xi32> to vector<1x128xi32>
    %13 = vector.broadcast %12 : vector<1x128xi32> to vector<16x128xi32>
    %14 = arith.cmpi eq, %10, %13 : vector<16x128xi32>
    %15 = arith.extui %14 : vector<16x128xi1> to vector<16x128xi32>
    %16 = arith.sitofp %15 : vector<16x128xi32> to vector<16x128xf32>
    %cst_6 = arith.constant dense<0.000000e+00> : vector<8x128xf32>
    %17 = tpu.matmul %6, %16, %cst_6 {dimension_numbers = #tpu.dot_dimension_numbers<[1], [0], [0], [1], [0, 0, 1, 1], [], []>} : vector<8x16xf32>, vector<16x128xf32>, vector<8x128xf32> -> vector<8x128xf32>
    %18 = vector.broadcast %9 : vector<8x1xf32> to vector<8x128xf32>
    %19 = arith.mulf %17, %18 : vector<8x128xf32>
    %cst_7 = arith.constant 0.000000e+00 : f32
    %20 = vector.broadcast %cst_7 : f32 to vector<8x128xf32>
    %21 = arith.subf %20, %19 : vector<8x128xf32>
    %c0_8 = arith.constant 0 : index
    %c0_9 = arith.constant 0 : index
    %c0_10 = arith.constant 0 : index
    %22 = vector.load %arg2[%c0_8, %c0_9, %c0_10] : memref<1x8x4xf32, #tpu.memory_space<vmem>>, vector<1x8x4xf32>
    %23 = vector.shape_cast %22 : vector<1x8x4xf32> to vector<8x4xf32>
    %c0_11 = arith.constant 0 : index
    %c0_12 = arith.constant 0 : index
    %c0_13 = arith.constant 0 : index
    %24 = vector.load %arg5[%c0_11, %c0_12, %c0_13] : memref<1x4x128xf32, #tpu.memory_space<vmem>>, vector<1x4x128xf32>
    %25 = vector.shape_cast %24 : vector<1x4x128xf32> to vector<4x128xf32>
    %c0_14 = arith.constant 0 : index
    %c0_15 = arith.constant 0 : index
    %c0_16 = arith.constant 0 : index
    %26 = vector.load %arg3[%c0_14, %c0_15, %c0_16] : memref<1x1x4xf32, #tpu.memory_space<vmem>>, vector<1x1x4xf32>
    %27 = vector.shape_cast %26 : vector<1x1x4xf32> to vector<1x4xf32>
    %cst_17 = arith.constant 1.000000e+00 : f32
    %28 = vector.broadcast %cst_17 : f32 to vector<1x4xf32>
    %29 = arith.divf %28, %27 : vector<1x4xf32>
    %c0_18 = arith.constant 0 : index
    %c0_19 = arith.constant 0 : index
    %c0_20 = arith.constant 0 : index
    %30 = vector.load %arg6[%c0_18, %c0_19, %c0_20] : memref<1x4x128xf32, #tpu.memory_space<vmem>>, vector<1x4x128xf32>
    %31 = vector.shape_cast %30 : vector<1x4x128xf32> to vector<4x128xf32>
    %cst_21 = arith.constant 1.000000e+00 : f32
    %32 = vector.broadcast %cst_21 : f32 to vector<4x128xf32>
    %33 = arith.divf %32, %31 : vector<4x128xf32>
    %34 = vector.extract_strided_slice %23 {offsets = [0, 0], sizes = [8, 1], strides = [1, 1]} : vector<8x4xf32> to vector<8x1xf32>
    %35 = vector.extract_strided_slice %23 {offsets = [0, 1], sizes = [8, 1], strides = [1, 1]} : vector<8x4xf32> to vector<8x1xf32>
    %36 = vector.extract_strided_slice %23 {offsets = [0, 2], sizes = [8, 1], strides = [1, 1]} : vector<8x4xf32> to vector<8x1xf32>
    %37 = vector.extract_strided_slice %23 {offsets = [0, 3], sizes = [8, 1], strides = [1, 1]} : vector<8x4xf32> to vector<8x1xf32>
    %38 = vector.extract_strided_slice %25 {offsets = [0, 0], sizes = [1, 128], strides = [1, 1]} : vector<4x128xf32> to vector<1x128xf32>
    %39 = vector.extract_strided_slice %25 {offsets = [1, 0], sizes = [1, 128], strides = [1, 1]} : vector<4x128xf32> to vector<1x128xf32>
    %40 = vector.extract_strided_slice %25 {offsets = [2, 0], sizes = [1, 128], strides = [1, 1]} : vector<4x128xf32> to vector<1x128xf32>
    %41 = vector.extract_strided_slice %25 {offsets = [3, 0], sizes = [1, 128], strides = [1, 1]} : vector<4x128xf32> to vector<1x128xf32>
    %cst_22 = arith.constant 0.000000e+00 : f32
    %42 = vector.broadcast %cst_22 : f32 to vector<8x128xf32>
    %43 = vector.extract_strided_slice %29 {offsets = [0, 0], sizes = [1, 1], strides = [1, 1]} : vector<1x4xf32> to vector<1x1xf32>
    %44 = vector.broadcast %43 : vector<1x1xf32> to vector<8x1xf32>
    %45 = arith.mulf %34, %44 : vector<8x1xf32>
    %46 = vector.extract_strided_slice %33 {offsets = [0, 0], sizes = [1, 128], strides = [1, 1]} : vector<4x128xf32> to vector<1x128xf32>
    %47 = arith.mulf %38, %46 : vector<1x128xf32>
    %48 = vector.broadcast %45 : vector<8x1xf32> to vector<8x128xf32>
    %49 = vector.broadcast %47 : vector<1x128xf32> to vector<8x128xf32>
    %50 = arith.subf %48, %49 : vector<8x128xf32>
    %51 = math.absf %50 : vector<8x128xf32>
    %52 = arith.addf %42, %51 : vector<8x128xf32>
    %53 = vector.extract_strided_slice %29 {offsets = [0, 1], sizes = [1, 1], strides = [1, 1]} : vector<1x4xf32> to vector<1x1xf32>
    %54 = vector.broadcast %53 : vector<1x1xf32> to vector<8x1xf32>
    %55 = arith.mulf %35, %54 : vector<8x1xf32>
    %56 = vector.extract_strided_slice %33 {offsets = [1, 0], sizes = [1, 128], strides = [1, 1]} : vector<4x128xf32> to vector<1x128xf32>
    %57 = arith.mulf %39, %56 : vector<1x128xf32>
    %58 = vector.broadcast %55 : vector<8x1xf32> to vector<8x128xf32>
    %59 = vector.broadcast %57 : vector<1x128xf32> to vector<8x128xf32>
    %60 = arith.subf %58, %59 : vector<8x128xf32>
    %61 = math.absf %60 : vector<8x128xf32>
    %62 = arith.addf %52, %61 : vector<8x128xf32>
    %63 = vector.extract_strided_slice %29 {offsets = [0, 2], sizes = [1, 1], strides = [1, 1]} : vector<1x4xf32> to vector<1x1xf32>
    %64 = vector.broadcast %63 : vector<1x1xf32> to vector<8x1xf32>
    %65 = arith.mulf %36, %64 : vector<8x1xf32>
    %66 = vector.extract_strided_slice %33 {offsets = [2, 0], sizes = [1, 128], strides = [1, 1]} : vector<4x128xf32> to vector<1x128xf32>
    %67 = arith.mulf %40, %66 : vector<1x128xf32>
    %68 = vector.broadcast %65 : vector<8x1xf32> to vector<8x128xf32>
    %69 = vector.broadcast %67 : vector<1x128xf32> to vector<8x128xf32>
    %70 = arith.subf %68, %69 : vector<8x128xf32>
    %71 = math.absf %70 : vector<8x128xf32>
    %72 = arith.addf %62, %71 : vector<8x128xf32>
    %73 = vector.extract_strided_slice %29 {offsets = [0, 3], sizes = [1, 1], strides = [1, 1]} : vector<1x4xf32> to vector<1x1xf32>
    %74 = vector.broadcast %73 : vector<1x1xf32> to vector<8x1xf32>
    %75 = arith.mulf %37, %74 : vector<8x1xf32>
    %76 = vector.extract_strided_slice %33 {offsets = [3, 0], sizes = [1, 128], strides = [1, 1]} : vector<4x128xf32> to vector<1x128xf32>
    %77 = arith.mulf %41, %76 : vector<1x128xf32>
    %78 = vector.broadcast %75 : vector<8x1xf32> to vector<8x128xf32>
    %79 = vector.broadcast %77 : vector<1x128xf32> to vector<8x128xf32>
    %80 = arith.subf %78, %79 : vector<8x128xf32>
    %81 = math.absf %80 : vector<8x128xf32>
    %82 = arith.addf %72, %81 : vector<8x128xf32>
    %83 = arith.subf %36, %34 : vector<8x1xf32>
    %84 = arith.subf %37, %35 : vector<8x1xf32>
    %85 = arith.mulf %83, %84 : vector<8x1xf32>
    %86 = arith.subf %40, %38 : vector<1x128xf32>
    %87 = arith.subf %41, %39 : vector<1x128xf32>
    %88 = arith.mulf %86, %87 : vector<1x128xf32>
    %89 = vector.broadcast %36 : vector<8x1xf32> to vector<8x128xf32>
    %90 = vector.broadcast %40 : vector<1x128xf32> to vector<8x128xf32>
    %91 = arith.minimumf %89, %90 : vector<8x128xf32>
    %92 = vector.broadcast %34 : vector<8x1xf32> to vector<8x128xf32>
    %93 = vector.broadcast %38 : vector<1x128xf32> to vector<8x128xf32>
    %94 = arith.maximumf %92, %93 : vector<8x128xf32>
    %95 = arith.subf %91, %94 : vector<8x128xf32>
    %cst_23 = arith.constant 0.000000e+00 : f32
    %96 = vector.broadcast %cst_23 : f32 to vector<8x128xf32>
    %97 = arith.maximumf %95, %96 : vector<8x128xf32>
    %98 = vector.broadcast %37 : vector<8x1xf32> to vector<8x128xf32>
    %99 = vector.broadcast %41 : vector<1x128xf32> to vector<8x128xf32>
    %100 = arith.minimumf %98, %99 : vector<8x128xf32>
    %101 = vector.broadcast %35 : vector<8x1xf32> to vector<8x128xf32>
    %102 = vector.broadcast %39 : vector<1x128xf32> to vector<8x128xf32>
    %103 = arith.maximumf %101, %102 : vector<8x128xf32>
    %104 = arith.subf %100, %103 : vector<8x128xf32>
    %cst_24 = arith.constant 0.000000e+00 : f32
    %105 = vector.broadcast %cst_24 : f32 to vector<8x128xf32>
    %106 = arith.maximumf %104, %105 : vector<8x128xf32>
    %107 = arith.mulf %97, %106 : vector<8x128xf32>
    %108 = vector.broadcast %85 : vector<8x1xf32> to vector<8x128xf32>
    %109 = vector.broadcast %88 : vector<1x128xf32> to vector<8x128xf32>
    %110 = arith.addf %108, %109 : vector<8x128xf32>
    %111 = arith.subf %110, %107 : vector<8x128xf32>
    %cst_25 = arith.constant 1.000000e-07 : f32
    %112 = vector.broadcast %cst_25 : f32 to vector<8x128xf32>
    %113 = arith.maximumf %111, %112 : vector<8x128xf32>
    %114 = tpu.reciprocal %113 {approx = true} : vector<8x128xf32> -> vector<8x128xf32>
    %115 = arith.mulf %107, %114 : vector<8x128xf32>
    %116 = vector.broadcast %36 : vector<8x1xf32> to vector<8x128xf32>
    %117 = vector.broadcast %40 : vector<1x128xf32> to vector<8x128xf32>
    %118 = arith.maximumf %116, %117 : vector<8x128xf32>
    %119 = vector.broadcast %34 : vector<8x1xf32> to vector<8x128xf32>
    %120 = vector.broadcast %38 : vector<1x128xf32> to vector<8x128xf32>
    %121 = arith.minimumf %119, %120 : vector<8x128xf32>
    %122 = arith.subf %118, %121 : vector<8x128xf32>
    %cst_26 = arith.constant 0.000000e+00 : f32
    %123 = vector.broadcast %cst_26 : f32 to vector<8x128xf32>
    %124 = arith.maximumf %122, %123 : vector<8x128xf32>
    %125 = vector.broadcast %37 : vector<8x1xf32> to vector<8x128xf32>
    %126 = vector.broadcast %41 : vector<1x128xf32> to vector<8x128xf32>
    %127 = arith.maximumf %125, %126 : vector<8x128xf32>
    %128 = vector.broadcast %35 : vector<8x1xf32> to vector<8x128xf32>
    %129 = vector.broadcast %39 : vector<1x128xf32> to vector<8x128xf32>
    %130 = arith.minimumf %128, %129 : vector<8x128xf32>
    %131 = arith.subf %127, %130 : vector<8x128xf32>
    %cst_27 = arith.constant 0.000000e+00 : f32
    %132 = vector.broadcast %cst_27 : f32 to vector<8x128xf32>
    %133 = arith.maximumf %131, %132 : vector<8x128xf32>
    %134 = arith.mulf %124, %133 : vector<8x128xf32>
    %cst_28 = arith.constant 1.000000e-07 : f32
    %135 = vector.broadcast %cst_28 : f32 to vector<8x128xf32>
    %136 = arith.maximumf %134, %135 : vector<8x128xf32>
    %137 = arith.subf %136, %111 : vector<8x128xf32>
    %138 = tpu.reciprocal %136 {approx = true} : vector<8x128xf32> -> vector<8x128xf32>
    %139 = arith.mulf %137, %138 : vector<8x128xf32>
    %140 = arith.subf %115, %139 : vector<8x128xf32>
    %cst_29 = arith.constant 1.000000e+00 : f32
    %141 = vector.broadcast %cst_29 : f32 to vector<8x128xf32>
    %142 = arith.mulf %141, %82 : vector<8x128xf32>
    %cst_30 = arith.constant 1.000000e+00 : f32
    %143 = vector.broadcast %cst_30 : f32 to vector<8x128xf32>
    %144 = arith.mulf %143, %21 : vector<8x128xf32>
    %145 = arith.addf %142, %144 : vector<8x128xf32>
    %cst_31 = arith.constant 1.000000e+00 : f32
    %146 = vector.broadcast %cst_31 : f32 to vector<8x128xf32>
    %147 = arith.mulf %146, %140 : vector<8x128xf32>
    %148 = arith.subf %145, %147 : vector<8x128xf32>
    %c0_32 = arith.constant 0 : index
    %c0_33 = arith.constant 0 : index
    %c0_34 = arith.constant 0 : index
    %149 = vector.load %arg7[%c0_32, %c0_33, %c0_34] : memref<1x8x128xf32, #tpu.memory_space<vmem>>, vector<1x8x128xf32>
    %150 = vector.shape_cast %149 : vector<1x8x128xf32> to vector<8x128xf32>
    %151 = vector.shape_cast %148 : vector<8x128xf32> to vector<1x8x128xf32>
    tpu.vector_store %arg7[%c0_32, %c0_33, %c0_34], %151 {strides = array<i32>} : memref<1x8x128xf32, #tpu.memory_space<vmem>>, vector<1x8x128xf32>,
    return
  }
  func.func @transform_0(%arg0: i32) -> (i32, i32, i32) {
    %c0_i32 = arith.constant 0 : i32
    %c0_i32_0 = arith.constant 0 : i32
    %c0_i32_1 = arith.constant 0 : i32
    return %arg0, %c0_i32, %c0_i32_0 : i32, i32, i32
  }
  func.func @transform_1(%arg0: i32) -> (i32, i32, i32) {
    %c0_i32 = arith.constant 0 : i32
    %c0_i32_0 = arith.constant 0 : i32
    %c0_i32_1 = arith.constant 0 : i32
    return %arg0, %c0_i32, %c0_i32_0 : i32, i32, i32
  }
  func.func @transform_2(%arg0: i32) -> (i32, i32, i32) {
    %c0_i32 = arith.constant 0 : i32
    %c0_i32_0 = arith.constant 0 : i32
    %c0_i32_1 = arith.constant 0 : i32
    return %arg0, %c0_i32, %c0_i32_0 : i32, i32, i32
  }
  func.func @transform_3(%arg0: i32) -> (i32, i32, i32) {
    %c0_i32 = arith.constant 0 : i32
    %c0_i32_0 = arith.constant 0 : i32
    %c0_i32_1 = arith.constant 0 : i32
    return %arg0, %c0_i32, %c0_i32_0 : i32, i32, i32
  }
  func.func @transform_4(%arg0: i32) -> (i32, i32, i32) {
    %c0_i32 = arith.constant 0 : i32
    %c0_i32_0 = arith.constant 0 : i32
    %c0_i32_1 = arith.constant 0 : i32
    return %arg0, %c0_i32, %c0_i32_0 : i32, i32, i32
  }
  func.func @transform_5(%arg0: i32) -> (i32, i32, i32) {
    %c0_i32 = arith.constant 0 : i32
    %c0_i32_0 = arith.constant 0 : i32
    %c0_i32_1 = arith.constant 0 : i32
    return %arg0, %c0_i32, %c0_i32_0 : i32, i32, i32
  }
  func.func @transform_6(%arg0: i32) -> (i32, i32, i32) {
    %c0_i32 = arith.constant 0 : i32
    %c0_i32_0 = arith.constant 0 : i32
    %c0_i32_1 = arith.constant 0 : i32
    return %arg0, %c0_i32, %c0_i32_0 : i32, i32, i32
  }
}

</mosaic_0001>

<llo_original>
// kernel: tpu_custom_call.1
$region0: #{tpu_custom_call.1}
  #allocation0 [shape = 'u32[]', space=smem, size = 0x4, offset = 0x4, fixed_abs, tag = 'smem constant byte address 0x4 - core index']
  #allocation1 [shape = 'u32[144,128]{1,0:T(1,128)}', space=vmem, size = 0x12000, scoped, tag = 'internal scratch']
  %s0 = inlined_call_operand.vmem [shape: f32[2,8,16], index: 0, kind: input, shape index: {}]
  %s1 = inlined_call_operand.vmem [shape: f32[2,8,4], index: 1, kind: input, shape index: {}]
  %s2 = inlined_call_operand.hbm [shape: f32[2,1,4], index: 2, kind: input, shape index: {}]
  %s3 = inlined_call_operand.hbm [shape: s32[2,1,128], index: 3, kind: input, shape index: {}]
  %s4 = inlined_call_operand.vmem [shape: f32[2,4,128], index: 4, kind: input, shape index: {}]
  %s5 = inlined_call_operand.vmem [shape: f32[2,4,128], index: 5, kind: input, shape index: {}]
  %s6 = inlined_call_operand.hbm [shape: f32[2,8,128], index: 6, kind: output, shape index: {}]
  %s7 = sld [smem:[#allocation0]]
  $region65: #{tpu_custom_call.1} parent=0
    _
  %s9 = ssub.s32 1, %s7
  %s10 = scalar_select 0, %s9, %s7
  $region1: #{tpu_custom_call.1} parent=0
    #allocation2 [shape = 'u8[1024]{0}', space=vmem, size = 0x400, scoped, tag = 'input window, operand 2']
    #allocation3 [shape = 's32[2]{0}', space=sflag, size = 0x8, scoped, tag = 'scoped memory for tpu_custom_call.1']
    #allocation4 [shape = 's32[2]{0}', space=sflag, size = 0x8, scoped, tag = 'scoped memory for tpu_custom_call.1']
    #allocation5 [shape = 'u8[1024]{0}', space=vmem, size = 0x400, scoped, tag = 'input window, operand 3']
    #allocation6 [shape = 's32[2]{0}', space=sflag, size = 0x8, scoped, tag = 'scoped memory for tpu_custom_call.1']
    #allocation7 [shape = 'u8[8192]{0}', space=vmem, size = 0x2000, scoped, tag = 'output window, operand 0']
    %11 = vsyncpa [#allocation3], 0
    %s12 = scalar_lea.sflag [#allocation3], 1
    %13 = vsyncpa %s12, 0
    %14 = vsyncpa [#allocation6], 0
    %s15 = scalar_lea.sflag [#allocation6], 1
    %16 = vsyncpa %s15, 0
    %17 = vsyncpa [#allocation4], 0
    %s18 = scalar_lea.sflag [#allocation4], 1
    %19 = vsyncpa %s18, 0
    loop: start=0, step=1, limit=4
    $region2: #{tpu_custom_call.1} parent=1 // loop_pre_header
      _
    $region3: #{tpu_custom_call.1} parent=1 // loop_header
      %s21 = sphi 0, %s25
      %p22 = scmp.ge.s32.totalorder %s21, 4
      %s31 = sphi 0, %s33
      %s34 = sphi 0, %s31
      %s35 = sphi 0, %s34
      %s51 = sphi 0, %s35
      %s57 = sphi 0, %s59
      %s60 = sphi 0, %s57
      %s61 = sphi 0, %s60
      %s77 = sphi 0, %s61
      %s83 = sphi 0, %s85
      %s86 = sphi 0, %s83
      %s87 = sphi 0, %s86
      %s103 = sphi 0, %s87
      %s109 = sphi 0, %s111
      %s112 = sphi 0, %s109
      %s113 = sphi 0, %s112
      %s129 = sphi 0, %s113
      %s135 = sphi 0, %s137
      %s138 = sphi 0, %s135
      %s139 = sphi 0, %s138
      %s155 = sphi 0, %s139
      %s161 = sphi 0, %s163
      %s164 = sphi 0, %s161
      %s165 = sphi 0, %s164
      %s181 = sphi 0, %s165
      %s187 = sphi 0, %s189
      %s190 = sphi 0, %s187
      %s191 = sphi 0, %s190
      %s207 = sphi 0, %s191
    $region4: #{tpu_custom_call.1} parent=1 // loop_header_branch
      %24 = sbr.rel (%p22) target = $region8
    $region5: #{tpu_custom_call.1} parent=1 // loop_body
      %s26 = ssub.s32 %s21, 1
      %s27 = ssub.s32 %s21, 2
      %s28 = sadd.s32 %s21, 1
      %s29 = ssub.s32 %s21, %s28
      %p30 = scmp.eq.s32.totalorder %s29, 0
      %s32 = sadd.s32 %s31, 1
      %s33 = scalar_select %p30, %s31, %s32
      %p36 = pneg %p30
      %p37 = scmp.eq.s32.totalorder %s21, 1
      %p38 = por %p36, %p37
      %p39 = scmp.ne.s32.totalorder %s31, %s34
      %p40 = scmp.eq.s32.totalorder %s21, 0
      %p41 = por %p39, %p40
      %p42 = scmp.ne.s32.totalorder %s31, %s34
      %p43 = scmp.eq.s32.totalorder %s26, 1
      %p44 = por %p42, %p43
      %p45 = scmp.ne.s32.totalorder %s34, %s35
      %p46 = scmp.eq.s32.totalorder %s26, 0
      %p47 = por %p45, %p46
      %p48 = scmp.ne.s32.totalorder %s34, %s35
      %p49 = scmp.eq.s32.totalorder %s27, 1
      %p50 = por %p48, %p49
      %p52 = scmp.ne.s32.totalorder %s35, %s51
      %p53 = scmp.eq.s32.totalorder %s27, 0
      %p54 = por %p52, %p53
      %s55 = ssub.s32 %s21, %s28
      %p56 = scmp.eq.s32.totalorder %s55, 0
      %s58 = sadd.s32 %s57, 1
      %s59 = scalar_select %p56, %s57, %s58
      %p62 = pneg %p56
      %p63 = scmp.eq.s32.totalorder %s21, 1
      %p64 = por %p62, %p63
      %p65 = scmp.ne.s32.totalorder %s57, %s60
      %p66 = scmp.eq.s32.totalorder %s21, 0
      %p67 = por %p65, %p66
      %p68 = scmp.ne.s32.totalorder %s57, %s60
      %p69 = scmp.eq.s32.totalorder %s26, 1
      %p70 = por %p68, %p69
      %p71 = scmp.ne.s32.totalorder %s60, %s61
      %p72 = scmp.eq.s32.totalorder %s26, 0
      %p73 = por %p71, %p72
      %p74 = scmp.ne.s32.totalorder %s60, %s61
      %p75 = scmp.eq.s32.totalorder %s27, 1
      %p76 = por %p74, %p75
      %p78 = scmp.ne.s32.totalorder %s61, %s77
      %p79 = scmp.eq.s32.totalorder %s27, 0
      %p80 = por %p78, %p79
      %s81 = ssub.s32 %s21, %s28
      %p82 = scmp.eq.s32.totalorder %s81, 0
      %s84 = sadd.s32 %s83, 1
      %s85 = scalar_select %p82, %s83, %s84
      %p88 = pneg %p82
      %p89 = scmp.eq.s32.totalorder %s21, 1
      %p90 = por %p88, %p89
      %p91 = scmp.ne.s32.totalorder %s83, %s86
      %p92 = scmp.eq.s32.totalorder %s21, 0
      %p93 = por %p91, %p92
      %p94 = scmp.ne.s32.totalorder %s83, %s86
      %p95 = scmp.eq.s32.totalorder %s26, 1
      %p96 = por %p94, %p95
      %p97 = scmp.ne.s32.totalorder %s86, %s87
      %p98 = scmp.eq.s32.totalorder %s26, 0
      %p99 = por %p97, %p98
      %p100 = scmp.ne.s32.totalorder %s86, %s87
      %p101 = scmp.eq.s32.totalorder %s27, 1
      %p102 = por %p100, %p101
      %p104 = scmp.ne.s32.totalorder %s87, %s103
      %p105 = scmp.eq.s32.totalorder %s27, 0
      %p106 = por %p104, %p105
      %s107 = ssub.s32 %s21, %s28
      %p108 = scmp.eq.s32.totalorder %s107, 0
      %s110 = sadd.s32 %s109, 1
      %s111 = scalar_select %p108, %s109, %s110
      %p114 = pneg %p108
      %p115 = scmp.eq.s32.totalorder %s21, 1
      %p116 = por %p114, %p115
      %p117 = scmp.ne.s32.totalorder %s109, %s112
      %p118 = scmp.eq.s32.totalorder %s21, 0
      %p119 = por %p117, %p118
      %p120 = scmp.ne.s32.totalorder %s109, %s112
      %p121 = scmp.eq.s32.totalorder %s26, 1
      %p122 = por %p120, %p121
      %p123 = scmp.ne.s32.totalorder %s112, %s113
      %p124 = scmp.eq.s32.totalorder %s26, 0
      %p125 = por %p123, %p124
      %p126 = scmp.ne.s32.totalorder %s112, %s113
      %p127 = scmp.eq.s32.totalorder %s27, 1
      %p128 = por %p126, %p127
      %p130 = scmp.ne.s32.totalorder %s113, %s129
      %p131 = scmp.eq.s32.totalorder %s27, 0
      %p132 = por %p130, %p131
      %s133 = ssub.s32 %s21, %s28
      %p134 = scmp.eq.s32.totalorder %s133, 0
      %s136 = sadd.s32 %s135, 1
      %s137 = scalar_select %p134, %s135, %s136
      %p140 = pneg %p134
      %p141 = scmp.eq.s32.totalorder %s21, 1
      %p142 = por %p140, %p141
      %p143 = scmp.ne.s32.totalorder %s135, %s138
      %p144 = scmp.eq.s32.totalorder %s21, 0
      %p145 = por %p143, %p144
      %p146 = scmp.ne.s32.totalorder %s135, %s138
      %p147 = scmp.eq.s32.totalorder %s26, 1
      %p148 = por %p146, %p147
      %p149 = scmp.ne.s32.totalorder %s138, %s139
      %p150 = scmp.eq.s32.totalorder %s26, 0
      %p151 = por %p149, %p150
      %p152 = scmp.ne.s32.totalorder %s138, %s139
      %p153 = scmp.eq.s32.totalorder %s27, 1
      %p154 = por %p152, %p153
      %p156 = scmp.ne.s32.totalorder %s139, %s155
      %p157 = scmp.eq.s32.totalorder %s27, 0
      %p158 = por %p156, %p157
      %s159 = ssub.s32 %s21, %s28
      %p160 = scmp.eq.s32.totalorder %s159, 0
      %s162 = sadd.s32 %s161, 1
      %s163 = scalar_select %p160, %s161, %s162
      %p166 = pneg %p160
      %p167 = scmp.eq.s32.totalorder %s21, 1
      %p168 = por %p166, %p167
      %p169 = scmp.ne.s32.totalorder %s161, %s164
      %p170 = scmp.eq.s32.totalorder %s21, 0
      %p171 = por %p169, %p170
      %p172 = scmp.ne.s32.totalorder %s161, %s164
      %p173 = scmp.eq.s32.totalorder %s26, 1
      %p174 = por %p172, %p173
      %p175 = scmp.ne.s32.totalorder %s164, %s165
      %p176 = scmp.eq.s32.totalorder %s26, 0
      %p177 = por %p175, %p176
      %p178 = scmp.ne.s32.totalorder %s164, %s165
      %p179 = scmp.eq.s32.totalorder %s27, 1
      %p180 = por %p178, %p179
      %p182 = scmp.ne.s32.totalorder %s165, %s181
      %p183 = scmp.eq.s32.totalorder %s27, 0
      %p184 = por %p182, %p183
      %s185 = ssub.s32 %s21, %s28
      %p186 = scmp.eq.s32.totalorder %s185, 0
      %s188 = sadd.s32 %s187, 1
      %s189 = scalar_select %p186, %s187, %s188
      %p192 = pneg %p186
      %p193 = scmp.eq.s32.totalorder %s21, 1
      %p194 = por %p192, %p193
      %p195 = scmp.ne.s32.totalorder %s187, %s190
      %p196 = scmp.eq.s32.totalorder %s21, 0
      %p197 = por %p195, %p196
      %p198 = scmp.ne.s32.totalorder %s187, %s190
      %p199 = scmp.eq.s32.totalorder %s26, 1
      %p200 = por %p198, %p199
      %p201 = scmp.ne.s32.totalorder %s190, %s191
      %p202 = scmp.eq.s32.totalorder %s26, 0
      %p203 = por %p201, %p202
      %p204 = scmp.ne.s32.totalorder %s190, %s191
      %p205 = scmp.eq.s32.totalorder %s27, 1
      %p206 = por %p204, %p205
      %p208 = scmp.ne.s32.totalorder %s191, %s207
      %p209 = scmp.eq.s32.totalorder %s27, 0
      %p210 = por %p208, %p209
      %p211 = scmp.le.s32.totalorder 1, %s21
      %p212 = scmp.lt.s32.totalorder %s21, 3
      %p213 = pnand %p211, %p212
      %p214 = pneg %p213
      // Predicated region
      $region9: #{tpu_custom_call.1} parent=5 // pred_check
        _
      $region10: #{tpu_custom_call.1} parent=5 // pred_check_branch
        %216 = sbr.rel (%p213) target = $region12
      $region11: #{tpu_custom_call.1} parent=5 // pred_region
        %s217 = ssub.s32 %s21, 1
      $region12: #{tpu_custom_call.1} parent=5 // pred_fallthru
        _
      %p218 = scmp.lt.s32.totalorder %s21, 2
      // Predicated region
      $region13: #{tpu_custom_call.1} parent=5 // pred_check
        %p219 = pneg %p218
      $region14: #{tpu_custom_call.1} parent=5 // pred_check_branch
        %221 = sbr.rel (%p219) target = $region16
      $region15: #{tpu_custom_call.1} parent=5 // pred_region
        // Predicated region
        $region17: #{tpu_custom_call.1} parent=15 // pred_check
          %p222 = pneg %p41
        $region18: #{tpu_custom_call.1} parent=15 // pred_check_branch
          %224 = sbr.rel (%p222) target = $region20
        $region19: #{tpu_custom_call.1} parent=15 // pred_region
          %p225 = scmp.lt.s32.totalorder %s21, 1
          %s226 = scalar_select %p225, %s21, 1
          %s227 = smul.addr %s226, 8
          %s228 = scalar_lea.vmem %s0, %s227
        $region20: #{tpu_custom_call.1} parent=15 // pred_fallthru
          _
        // Predicated region
        $region21: #{tpu_custom_call.1} parent=15 // pred_check
          %p229 = pneg %p67
        $region22: #{tpu_custom_call.1} parent=15 // pred_check_branch
          %231 = sbr.rel (%p229) target = $region24
        $region23: #{tpu_custom_call.1} parent=15 // pred_region
          %p232 = scmp.lt.s32.totalorder %s21, 1
          %s233 = scalar_select %p232, %s21, 1
          %s234 = smul.addr %s233, 8
          %s235 = scalar_lea.vmem %s1, %s234
        $region24: #{tpu_custom_call.1} parent=15 // pred_fallthru
          _
        // Predicated region
        $region25: #{tpu_custom_call.1} parent=15 // pred_check
          %p236 = pneg %p93
        $region26: #{tpu_custom_call.1} parent=15 // pred_check_branch
          %238 = sbr.rel (%p236) target = $region28
        $region27: #{tpu_custom_call.1} parent=15 // pred_region
          %s239 = sand.u32 %s83, 1
          %s240 = scalar_lea.sflag [#allocation3], %s239
          %s241 = sand.u32 %s83, 1
          %s242 = scalar_lea.vmem [#allocation2], %s241
          %s244 = ssub.s32 16, 16
          %245 = vsyncadd %s240, %s244
          %s246 = smul.addr %s21, 16
          %s247 = scalar_lea.hbm %s2, %s246
          %s249 = sshll.u32 %s242, 4
          %s250 = int_to_ptr.vmem [resolvable:$true] %s249
          %252 = dma.hbm_to_vmem [thread:$0]  %s247, 16, %s250, %s240
        $region28: #{tpu_custom_call.1} parent=15 // pred_fallthru
          _
        // Predicated region
        $region29: #{tpu_custom_call.1} parent=15 // pred_check
          %p253 = pneg %p119
        $region30: #{tpu_custom_call.1} parent=15 // pred_check_branch
          %255 = sbr.rel (%p253) target = $region32
        $region31: #{tpu_custom_call.1} parent=15 // pred_region
          %s256 = sand.u32 %s109, 1
          %s257 = scalar_lea.sflag [#allocation6], %s256
          %s258 = sand.u32 %s109, 1
          %s259 = scalar_lea.vmem [#allocation5], %s258
          %s261 = ssub.s32 16, 16
          %262 = vsyncadd %s257, %s261
          %s263 = smul.addr %s21, 16
          %s264 = scalar_lea.hbm %s3, %s263
          %s266 = sshll.u32 %s259, 4
          %s267 = int_to_ptr.vmem [resolvable:$true] %s266
          %269 = dma.hbm_to_vmem [thread:$0]  %s264, 16, %s267, %s257
        $region32: #{tpu_custom_call.1} parent=15 // pred_fallthru
          _
        // Predicated region
        $region33: #{tpu_custom_call.1} parent=15 // pred_check
          %p270 = pneg %p145
        $region34: #{tpu_custom_call.1} parent=15 // pred_check_branch
          %272 = sbr.rel (%p270) target = $region36
        $region35: #{tpu_custom_call.1} parent=15 // pred_region
          %p273 = scmp.lt.s32.totalorder %s21, 1
          %s274 = scalar_select %p273, %s21, 1
          %s275 = smul.addr %s274, 4
          %s276 = scalar_lea.vmem %s4, %s275
        $region36: #{tpu_custom_call.1} parent=15 // pred_fallthru
          _
        // Predicated region
        $region37: #{tpu_custom_call.1} parent=15 // pred_check
          %p277 = pneg %p171
        $region38: #{tpu_custom_call.1} parent=15 // pred_check_branch
          %279 = sbr.rel (%p277) target = $region40
        $region39: #{tpu_custom_call.1} parent=15 // pred_region
          %p280 = scmp.lt.s32.totalorder %s21, 1
          %s281 = scalar_select %p280, %s21, 1
          %s282 = smul.addr %s281, 4
          %s283 = scalar_lea.vmem %s5, %s282
        $region40: #{tpu_custom_call.1} parent=15 // pred_fallthru
          _
      $region16: #{tpu_custom_call.1} parent=5 // pred_fallthru
        _
      %p284 = scmp.le.s32.totalorder 1, %s21
      %p285 = scmp.lt.s32.totalorder %s21, 3
      %p286 = pnand %p284, %p285
      %p287 = pneg %p286
      // Predicated region
      $region41: #{tpu_custom_call.1} parent=5 // pred_check
        _
      $region42: #{tpu_custom_call.1} parent=5 // pred_check_branch
        %289 = sbr.rel (%p286) target = $region44
      $region43: #{tpu_custom_call.1} parent=5 // pred_region
        %s290 = ssub.s32 %s21, 1
        %s291 = sand.u32 %s86, 1
        %s292 = scalar_lea.sflag [#allocation3], %s291
        %s293 = sand.u32 %s86, 1
        %s294 = scalar_lea.vmem [#allocation2], %s293
        // Predicated region
        $region45: #{tpu_custom_call.1} parent=43 // pred_check
          %p295 = pneg %p99
        $region46: #{tpu_custom_call.1} parent=43 // pred_check_branch
          %297 = sbr.rel (%p295) target = $region48
        $region47: #{tpu_custom_call.1} parent=43 // pred_region
          %298 = dma.done %s292, 16
        $region48: #{tpu_custom_call.1} parent=43 // pred_fallthru
          _
        %s299 = sand.u32 %s112, 1
        %s300 = scalar_lea.sflag [#allocation6], %s299
        %s301 = sand.u32 %s112, 1
        %s302 = scalar_lea.vmem [#allocation5], %s301
        // Predicated region
        $region49: #{tpu_custom_call.1} parent=43 // pred_check
          %p303 = pneg %p125
        $region50: #{tpu_custom_call.1} parent=43 // pred_check_branch
          %305 = sbr.rel (%p303) target = $region52
        $region51: #{tpu_custom_call.1} parent=43 // pred_region
          %306 = dma.done %s300, 16
        $region52: #{tpu_custom_call.1} parent=43 // pred_fallthru
          _
        %p307 = scmp.lt.s32.totalorder %s26, 1
        %s308 = scalar_select %p307, %s26, 1
        %s309 = smul.addr %s308, 8
        %s310 = scalar_lea.vmem %s0, %s309
        %p311 = pneg %p47
        %p312 = pneg %p44
        %p313 = scmp.lt.s32.totalorder %s26, 1
        %s314 = scalar_select %p313, %s26, 1
        %s315 = smul.addr %s314, 8
        %s316 = scalar_lea.vmem %s1, %s315
        %p317 = pneg %p73
        %p318 = pneg %p70
        %s319 = sand.u32 %s86, 1
        %s320 = scalar_lea.sflag [#allocation3], %s319
        %s321 = sand.u32 %s86, 1
        %s322 = scalar_lea.vmem [#allocation2], %s321
        %p323 = pneg %p99
        %p324 = pneg %p96
        %s325 = sand.u32 %s112, 1
        %s326 = scalar_lea.sflag [#allocation6], %s325
        %s327 = sand.u32 %s112, 1
        %s328 = scalar_lea.vmem [#allocation5], %s327
        %p329 = pneg %p125
        %p330 = pneg %p122
        %p331 = scmp.lt.s32.totalorder %s26, 1
        %s332 = scalar_select %p331, %s26, 1
        %s333 = smul.addr %s332, 4
        %s334 = scalar_lea.vmem %s4, %s333
        %p335 = pneg %p151
        %p336 = pneg %p148
        %p337 = scmp.lt.s32.totalorder %s26, 1
        %s338 = scalar_select %p337, %s26, 1
        %s339 = smul.addr %s338, 4
        %s340 = scalar_lea.vmem %s5, %s339
        %p341 = pneg %p177
        %p342 = pneg %p174
        %p343 = pneg %p203
        %p344 = pneg %p200
        %s345 = sand.u32 %s190, 1
        %s346 = scalar_lea.sflag [#allocation4], %s345
        %s347 = sand.u32 %s190, 1
        %s348 = smul.addr %s347, 8
        %s349 = scalar_lea.vmem [#allocation7], %s348
        %p350 = scmp.lt.s32.totalorder %s26, 1
        %s351 = scalar_select %p350, %s26, 1
        %s352 = smul.addr %s351, 8
        %s353 = scalar_lea.vmem %s0, %s352
        %p354 = scmp.lt.s32.totalorder %s26, 1
        %s355 = scalar_select %p354, %s26, 1
        %s356 = smul.addr %s355, 8
        %s357 = scalar_lea.vmem %s1, %s356
        %p358 = scmp.lt.s32.totalorder %s26, 1
        %s359 = scalar_select %p358, %s26, 1
        %s360 = smul.addr %s359, 4
        %s361 = scalar_lea.vmem %s4, %s360
        %p362 = scmp.lt.s32.totalorder %s26, 1
        %s363 = scalar_select %p362, %s26, 1
        %s364 = smul.addr %s363, 4
        %s365 = scalar_lea.vmem %s5, %s364
        %v366 = vld [vmem:[%s353] sm:$0xff]
        %vm367 = vcmask 130048
        %v368 = vsel %vm367, %v366, -inf
        %369 = vmax.xlane.f32.xlu0 %v368
        %v370 = vpop.xlane.xlu0 %369
        %v371 = vsub.f32 %v366, %v370
        %v372 = vmul.f32 %v371, 1.442695
        %v373 = vpow.pop %v372
        %v374 = vsel %vm367, %v373, 0.0
        %375 = vadd.xlane.f32.xlu0 %v374
        %v376 = vpop.xlane.xlu0 %375
        %v377 = vrcp.pop %v376
        %v378 = vlaneseq
        %v379 = vshrl.u32 %v378, 7
        %v380 = vadd.s32 %v379, 8
        %v381 = vld [vmem:[%s302] sm:$0x1]
        %v382 = vlaneseq
        %v383 = vshrl.u32 %v382, 7
        %v384 = vsub.s32 0, %v383
        %v385 = vrot.slane %v381, %v384
        %vm386 = vcmp.eq.s32.totalorder %v379, %v385
        %vm387 = vcmp.eq.s32.totalorder %v380, %v385
        %v388 = vsel %vm386, 1, 0
        %v389 = vsel %vm387, 1, 0
        %v390 = vcvt.s32.f32 %v388
        %v391 = vcvt.s32.f32 %v389
        %v393 = vsel %vm367, %v373, 0
        %395 = vmatprep.subr.mxu0 0.0
        %396 = vmatpush1.msra.mxu0 0.0
        %397 = vmatprep.subr.mxu0 0.0
        %398 = vmatpush1.msra.mxu0 0.0
        %399 = vmatprep.subr.mxu0 0.0
        %400 = vmatpush1.msra.mxu0 0.0
        %401 = vmatprep.subr.mxu0 0.0
        %402 = vmatpush1.msra.mxu0 0.0
        %403 = vmatprep.subr.mxu0 0.0
        %404 = vmatpush1.msra.mxu0 0.0
        %405 = vmatprep.subr.mxu0 0.0
        %406 = vmatpush1.msra.mxu0 0.0
        %407 = vmatprep.subr.mxu0 0.0
        %408 = vmatpush1.msra.mxu0 0.0
        %409 = vmatprep.subr.mxu0 0.0
        %410 = vmatpush1.msra.mxu0 0.0
        %411 = vmatprep.subr.mxu0 0.0
        %412 = vmatpush1.msra.mxu0 0.0
        %413 = vmatprep.subr.mxu0 0.0
        %414 = vmatpush1.msra.mxu0 0.0
        %415 = vmatprep.subr.mxu0 0.0
        %416 = vmatpush1.msra.mxu0 0.0
        %417 = vmatprep.subr.mxu0 0.0
        %418 = vmatpush1.msra.mxu0 0.0
        %419 = vmatprep.subr.mxu0 0.0
        %420 = vmatpush1.msra.mxu0 0.0
        %421 = vmatprep.subr.mxu0 0.0
        %422 = vmatpush1.msra.mxu0 0.0
        %423 = vmatprep.subr.mxu0 0.0
        %424 = vmatpush1.msra.mxu0 %v391
        %425 = vmatprep.subr.mxu0 0.0
        %426 = vmatpush1.msra.mxu0 %v390
        %427 = vmatprep.subr.mxu0 0.0
        %428 = vmatpush2.msra.mxu0 0.0
        %429 = vmatprep.subr.mxu0 0.0
        %430 = vmatpush2.msra.mxu0 0.0
        %431 = vmatprep.subr.mxu0 0.0
        %432 = vmatpush2.msra.mxu0 0.0
        %433 = vmatprep.subr.mxu0 0.0
        %434 = vmatpush2.msra.mxu0 0.0
        %435 = vmatprep.subr.mxu0 0.0
        %436 = vmatpush2.msra.mxu0 0.0
        %437 = vmatprep.subr.mxu0 0.0
        %438 = vmatpush2.msra.mxu0 0.0
        %439 = vmatprep.subr.mxu0 0.0
        %440 = vmatpush2.msra.mxu0 0.0
        %441 = vmatprep.subr.mxu0 0.0
        %442 = vmatpush2.msra.mxu0 0.0
        %443 = vmatprep.subr.mxu0 0.0
        %444 = vmatpush2.msra.mxu0 0.0
        %445 = vmatprep.subr.mxu0 0.0
        %446 = vmatpush2.msra.mxu0 0.0
        %447 = vmatprep.subr.mxu0 0.0
        %448 = vmatpush2.msra.mxu0 0.0
        %449 = vmatprep.subr.mxu0 0.0
        %450 = vmatpush2.msra.mxu0 0.0
        %451 = vmatprep.subr.mxu0 0.0
        %452 = vmatpush2.msra.mxu0 0.0
        %453 = vmatprep.subr.mxu0 0.0
        %454 = vmatpush2.msra.mxu0 0.0
        %455 = vmatprep.subr.mxu0 0.0
        %456 = vmatpush2.msra.mxu0 0.0
        %457 = vmatprep.subr.mxu0 0.0
        %458 = vmatpush2.msra.mxu0 0.0
        %459 = vmatprep.mubr.f32.mxu0 0.0
        %460 = vmatmul.mubr.f32.gmra.mxu0 %v393
        %v461 = vpop.f32.mrf.mxu0
        %v462 = vadd.f32 0.0, %v461
        %v463 = vpop.f32.mrf.mxu0
        %464 = vdwg.mxu0
        %v465 = vmul.f32 %v462, %v377
        %v466 = vsub.f32 0.0, %v465
        %v467 = vld [vmem:[%s357] sm:$0xff]
        %v468 = vld [vmem:[%s361] sm:$0xf]
        %v469 = vld [vmem:[%s294] sm:$0x1]
        %v470 = vrcp.pop %v469
        %v471 = vmul.f32 1.0, %v470
        %v472 = vld [vmem:[%s365] sm:$0xf]
        %v473 = vrcp.pop %v472
        %v474 = vmul.f32 1.0, %v473
        %v476 = vlaneseq
        %v477 = vshrl.u32 %v476, 7
        %v478 = vsub.s32 0, %v477
        %v479 = vrot.slane %v471, %v478
        %v481 = vmul.f32 %v467, %v479
        %v482 = vmul.f32 %v468, %v474
        %484 = vset.pattern.permute.xlu0 0
        %485 = vperm.xlu0 %484, %v481
        %v486 = vpop.permute.xlu0 %485
        %v488 = vlaneseq
        %v489 = vshrl.u32 %v488, 7
        %v490 = vsub.s32 0, %v489
        %v491 = vrot.slane %v482, %v490
        %v492 = vsub.f32 %v486, %v491
        %v493 = vand.u32 2147483647, %v492
        %v494 = vadd.f32 %v493, 0.0
        %495 = vset.pattern.permute.xlu0 1
        %496 = vperm.xlu0 %495, %v481
        %v497 = vpop.permute.xlu0 %496
        %v499 = vlaneseq
        %v500 = vshrl.u32 %v499, 7
        %v501 = vsub.s32 1, %v500
        %v502 = vrot.slane %v482, %v501
        %v503 = vsub.f32 %v497, %v502
        %v504 = vand.u32 2147483647, %v503
        %v505 = vadd.f32 %v494, %v504
        %506 = vset.pattern.permute.xlu0 2
        %507 = vperm.xlu0 %506, %v481
        %v508 = vpop.permute.xlu0 %507
        %v510 = vlaneseq
        %v511 = vshrl.u32 %v510, 7
        %v512 = vsub.s32 2, %v511
        %v513 = vrot.slane %v482, %v512
        %v514 = vsub.f32 %v508, %v513
        %v515 = vand.u32 2147483647, %v514
        %v516 = vadd.f32 %v505, %v515
        %517 = vset.pattern.permute.xlu0 3
        %518 = vperm.xlu0 %517, %v481
        %v519 = vpop.permute.xlu0 %518
        %v521 = vlaneseq
        %v522 = vshrl.u32 %v521, 7
        %v523 = vsub.s32 3, %v522
        %v524 = vrot.slane %v482, %v523
        %v525 = vsub.f32 %v519, %v524
        %v526 = vand.u32 2147483647, %v525
        %v527 = vadd.f32 %v516, %v526
        %529 = vrot.lane.b32.xlu0 %v467, 2
        %v530 = vpop.permute.xlu0 %529
        %v532 = vsub.f32 %v467, %v530
        %534 = vrot.lane.b32.xlu0 %v532, 127
        %v535 = vpop.permute.xlu0 %534
        %v537 = vmul.f32 %v532, %v535
        %v539 = vrot.slane %v468, 6
        %v541 = vsub.f32 %v468, %v539
        %v543 = vrot.slane %v541, 1
        %v545 = vmul.f32 %v541, %v543
        %546 = vset.pattern.permute.xlu0 2
        %547 = vperm.xlu0 %546, %v467
        %v548 = vpop.permute.xlu0 %547
        %v550 = vlaneseq
        %v551 = vshrl.u32 %v550, 7
        %v552 = vsub.s32 2, %v551
        %v553 = vrot.slane %v468, %v552
        %v554 = vmin.f32 %v548, %v553
        %555 = vset.pattern.permute.xlu0 0
        %556 = vperm.xlu0 %555, %v467
        %v557 = vpop.permute.xlu0 %556
        %v559 = vlaneseq
        %v560 = vshrl.u32 %v559, 7
        %v561 = vsub.s32 0, %v560
        %v562 = vrot.slane %v468, %v561
        %v563 = vmax.f32 %v557, %v562
        %v564 = vsub.f32 %v554, %v563
        %v565 = vmax.f32 %v564, 0.0
        %566 = vset.pattern.permute.xlu0 3
        %567 = vperm.xlu0 %566, %v467
        %v568 = vpop.permute.xlu0 %567
        %v570 = vlaneseq
        %v571 = vshrl.u32 %v570, 7
        %v572 = vsub.s32 3, %v571
        %v573 = vrot.slane %v468, %v572
        %v574 = vmin.f32 %v568, %v573
        %575 = vset.pattern.permute.xlu0 1
        %576 = vperm.xlu0 %575, %v467
        %v577 = vpop.permute.xlu0 %576
        %v579 = vlaneseq
        %v580 = vshrl.u32 %v579, 7
        %v581 = vsub.s32 1, %v580
        %v582 = vrot.slane %v468, %v581
        %v583 = vmax.f32 %v577, %v582
        %v584 = vsub.f32 %v574, %v583
        %v585 = vmax.f32 %v584, 0.0
        %v586 = vmul.f32 %v565, %v585
        %588 = vset.pattern.permute.xlu0 2
        %589 = vperm.xlu0 %588, %v537
        %v590 = vpop.permute.xlu0 %589
        %v592 = vlaneseq
        %v593 = vshrl.u32 %v592, 7
        %v594 = vsub.s32 2, %v593
        %v595 = vrot.slane %v545, %v594
        %v596 = vadd.f32 %v590, %v595
        %v597 = vsub.f32 %v596, %v586
        %v598 = vmax.f32 %v597, 1e-07
        %v599 = vrcp.pop %v598
        %v600 = vmul.f32 %v586, %v599
        %v601 = vmax.f32 %v548, %v553
        %v602 = vmin.f32 %v557, %v562
        %v603 = vsub.f32 %v601, %v602
        %v604 = vmax.f32 %v603, 0.0
        %v605 = vmax.f32 %v568, %v573
        %v606 = vmin.f32 %v577, %v582
        %v607 = vsub.f32 %v605, %v606
        %v608 = vmax.f32 %v607, 0.0
        %v609 = vmul.f32 %v604, %v608
        %v610 = vmax.f32 %v609, 1e-07
        %v611 = vsub.f32 %v610, %v597
        %v612 = vrcp.pop %v610
        %v613 = vmul.f32 %v611, %v612
        %v614 = vsub.f32 %v600, %v613
        %v615 = vadd.f32 %v527, %v466
        %v616 = vsub.f32 %v615, %v614
        %617 = vst [vmem:[%s349] sm:$0xff] %v616
        %s618 = sand.u32 %s190, 1
        %s619 = scalar_lea.sflag [#allocation4], %s618
        %s620 = sand.u32 %s190, 1
        %s621 = smul.addr %s620, 8
        %s622 = scalar_lea.vmem [#allocation7], %s621
        // Predicated region
        $region53: #{tpu_custom_call.1} parent=43 // pred_check
          %p623 = pneg %p200
        $region54: #{tpu_custom_call.1} parent=43 // pred_check_branch
          %625 = sbr.rel (%p623) target = $region56
        $region55: #{tpu_custom_call.1} parent=43 // pred_region
          %s627 = ssub.s32 128, 128
          %628 = vsyncadd %s619, %s627
          %s629 = smul.addr %s26, 128
          %s630 = scalar_lea.hbm %s6, %s629
          %s632 = sshll.u32 %s622, 4
          %s633 = int_to_ptr.vmem [resolvable:$true] %s632
          %635 = dma.vmem_to_hbm [thread:$0]  %s633, 128, %s630, %s619
        $region56: #{tpu_custom_call.1} parent=43 // pred_fallthru
          _
      $region44: #{tpu_custom_call.1} parent=5 // pred_fallthru
        _
      %p636 = scmp.le.s32.totalorder 2, %s21
      // Predicated region
      $region57: #{tpu_custom_call.1} parent=5 // pred_check
        %p637 = pneg %p636
      $region58: #{tpu_custom_call.1} parent=5 // pred_check_branch
        %639 = sbr.rel (%p637) target = $region60
      $region59: #{tpu_custom_call.1} parent=5 // pred_region
        %s640 = ssub.s32 %s21, 2
        // Predicated region
        $region61: #{tpu_custom_call.1} parent=59 // pred_check
          %p641 = pneg %p206
        $region62: #{tpu_custom_call.1} parent=59 // pred_check_branch
          %643 = sbr.rel (%p641) target = $region64
        $region63: #{tpu_custom_call.1} parent=59 // pred_region
          %s644 = sand.u32 %s191, 1
          %s645 = scalar_lea.sflag [#allocation4], %s644
          %s646 = sand.u32 %s191, 1
          %s647 = smul.addr %s646, 8
          %s648 = scalar_lea.vmem [#allocation7], %s647
          %649 = dma.done %s645, 128
        $region64: #{tpu_custom_call.1} parent=59 // pred_fallthru
          _
      $region60: #{tpu_custom_call.1} parent=5 // pred_fallthru
        _
    $region6: #{tpu_custom_call.1} parent=1 // loop_footer
      %s25 = sadd.s32 1, %s21
    $region7: #{tpu_custom_call.1} parent=1 // loop_footer_branch
      %20 = sbr.rel target = $region3
    $region8: #{tpu_custom_call.1} parent=1 // loop_exit
      _
    %650 = vsyncpa [#allocation3], 1
    %s651 = scalar_lea.sflag [#allocation3], 1
    %652 = vsyncpa %s651, 1
    %653 = vsyncpa [#allocation6], 1
    %s654 = scalar_lea.sflag [#allocation6], 1
    %655 = vsyncpa %s654, 1
    %656 = vsyncpa [#allocation4], 1
    %s657 = scalar_lea.sflag [#allocation4], 1
    %658 = vsyncpa %s657, 1

</llo_original>
